<compile_context>
chip_gen: v7x
topology: tpu7x:2x2x1
jax: 0.10.0
libtpu: 0.0.40
codegen_flags: <defaults>
</compile_context>

<pallas_src>
import functools

import jax
import jax.numpy as jnp
from jax import lax
from jax.experimental import pallas as pl
from jax.experimental.pallas import tpu as pltpu


def _inverted_residual_kernel(x_ref, w1_ref, b1_ref, w2_ref, b2_ref, out_ref,
                              *, H, W, use_res):
    """Fused InvertedResidual (stride=1) for a block of `block_n` images.

    x_ref:   (block_n, C, H*W)    NCHW input, flattened spatially (original dtype)
    w1_ref:  (hidden, 9*C)        3x3 conv weights (BN folded); col = (ki*3+kj)*C + c
    b1_ref:  (hidden, 1)          folded BN bias of the 3x3 conv (f32)
    w2_ref:  (Cout, hidden)       1x1 conv weights (BN folded)
    b2_ref:  (Cout, 1)            folded BN bias of the 1x1 conv (f32)
    out_ref: (block_n, Cout, H*W) NCHW output, flattened spatially (lane-dense)
    """
    B, C, M = x_ref.shape
    hidden = w1_ref.shape[0]
    Cout = w2_ref.shape[0]
    cdt = w1_ref.dtype

    # Full-precision activations: used for the lane shifts and for the residual add
    # (PyTorch adds the *unquantized* input); cast to the MXU dtype only for the slab.
    xf = x_ref[...].astype(jnp.float32)                             # (B, C, M)

    # Validity masks for the shifted taps (computed once per grid step from an iota).
    midx = lax.broadcasted_iota(jnp.int32, (1, 1, M), 2)            # flattened pixel idx
    col = midx % W
    row_ok = {-1: midx >= W, 0: None, 1: midx < (H - 1) * W}
    col_ok = {-1: col >= 1, 0: None, 1: col <= W - 2}

    # im2col in the transposed orientation: 9 lane-shifted copies of the image stacked
    # along sublanes -> (B, 9*C, M).  jnp.roll lowers to two static lane slices + a
    # concat (pltpu.roll / XLU rotate is an equivalent alternative); taps that fall
    # outside the image ('SAME' zero padding) are masked to zero.
    pieces = []
    for di in (-1, 0, 1):
        for dj in (-1, 0, 1):
            off = di * W + dj
            shifted = xf if off == 0 else jnp.roll(xf, -off, axis=2)
            r, c = row_ok[di], col_ok[dj]
            mask = r if c is None else (c if r is None else jnp.logical_and(r, c))
            pieces.append(shifted if mask is None else jnp.where(mask, shifted, 0.0))
    slab = jnp.concatenate(pieces, axis=1).astype(cdt)              # (B, 9C, M)

    # 'exp_1x1' (3x3 conv) + folded BN + ReLU6: one batched MXU matmul for the block.
    w1b = jnp.broadcast_to(w1_ref[...][None], (B, hidden, 9 * C))
    hid = jnp.einsum("bkc,bcm->bkm", w1b, slab,
                     preferred_element_type=jnp.float32)            # (B, hidden, M)
    hid = jnp.clip(hid + b1_ref[...], 0.0, 6.0)

    # 'red_1x1' (1x1 conv) + folded BN (no activation): second batched MXU matmul.
    w2b = jnp.broadcast_to(w2_ref[...][None], (B, Cout, hidden))
    y = jnp.einsum("bok,bkm->bom", w2b, hid.astype(cdt),
                   preferred_element_type=jnp.float32)              # (B, Cout, M)
    y = y + b2_ref[...]

    if use_res:
        y = y + xf                                                  # full-precision residual

    out_ref[...] = y.astype(out_ref.dtype)                          # lane-dense NCHW store


def _auto_block_n(n, max_per_step=8):
    """Largest divisor of n with <= max_per_step images per grid step, while keeping the
    grid length >= 2 (v7x has two TensorCores sharding the 'parallel' batch axis)."""
    best = 1
    for bn in range(1, min(n, max_per_step) + 1):
        if n % bn == 0 and (n // bn >= 2 or n == 1):
            best = bn
    return best


def inverted_residual(x_nchw, params, block_n=None):
    """NCHW in / NCHW out wrapper around the fused Pallas kernel."""
    w1t, b1, w2t, b2 = params["w1t"], params["b1"], params["w2t"], params["b2"]
    use_res = params["use_res"]

    N, C, H, W = x_nchw.shape
    M = H * W
    hidden = w1t.shape[0]
    Cout = w2t.shape[0]
    assert w1t.shape[1] == 9 * C and w2t.shape[1] == hidden
    assert (not use_res) or C == Cout
    if block_n is None:
        block_n = _auto_block_n(N)
    assert 1 <= block_n <= N and N % block_n == 0

    # Free reshape only: no transpose, no pad, no cast in HBM (the MXU-dtype cast and
    # the zero halo are both handled inside the kernel).
    x_flat = x_nchw.reshape(N, C, M)

    # Explicit VMEM budget with headroom (v7x: 64 MiB physical / 32 MiB scoped default,
    # v5e: 16 MiB scoped default): double-buffered in/out blocks + slab/hid/y temps.
    itemsize = jnp.dtype(w1t.dtype).itemsize
    per_step = block_n * M * (2 * C * 4 + 2 * Cout * 4 + 9 * C * (4 + itemsize)
                              + hidden * (4 + itemsize) + 2 * Cout * 4)
    weight_bytes = 2 * ((hidden * 9 * C + Cout * hidden) * itemsize + (hidden + Cout) * 4)
    vmem_limit = int(min(64 * 2 ** 20, max(8 * 2 ** 20, 4 * (per_step + weight_bytes))))

    kernel = functools.partial(_inverted_residual_kernel, H=H, W=W, use_res=use_res)

    out = pl.pallas_call(
        kernel,
        out_shape=jax.ShapeDtypeStruct((N, Cout, M), x_nchw.dtype),
        grid=(N // block_n,),
        in_specs=[
            pl.BlockSpec((block_n, C, M), lambda n: (n, 0, 0)),
            pl.BlockSpec((hidden, 9 * C), lambda n: (0, 0)),
            pl.BlockSpec((hidden, 1), lambda n: (0, 0)),
            pl.BlockSpec((Cout, hidden), lambda n: (0, 0)),
            pl.BlockSpec((Cout, 1), lambda n: (0, 0)),
        ],
        out_specs=pl.BlockSpec((block_n, Cout, M), lambda n: (n, 0, 0)),
        compiler_params=pltpu.CompilerParams(
            dimension_semantics=("parallel",),
            vmem_limit_bytes=vmem_limit),
    )(x_flat, w1t, b1, w2t, b2)

    return out.reshape(N, Cout, H, W)   # free reshape back to NCHW


def make_params(key, inp, oup, stride, expand_ratio, eps=1e-5,
                compute_dtype=jnp.bfloat16):
    """Deterministic synthetic parameters; BatchNorm folded into the convs (inference)."""
    assert stride == 1, "kernel implements the stride=1 configuration"
    assert expand_ratio != 1, "expand_ratio == 1 variant (no exp_1x1) not implemented"
    hidden = int(round(inp * expand_ratio))
    ks = jax.random.split(key, 10)

    # 'exp_1x1' (3x3): Conv2d(inp, hidden, 3, 1, 1, bias=False) + BN + ReLU6
    w1 = 0.2 * jax.random.normal(ks[0], (hidden, inp, 3, 3), jnp.float32)   # OIHW
    g1 = 1.0 + 0.1 * jax.random.normal(ks[1], (hidden,), jnp.float32)
    beta1 = 0.1 * jax.random.normal(ks[2], (hidden,), jnp.float32)
    mu1 = 0.1 * jax.random.normal(ks[3], (hidden,), jnp.float32)
    var1 = 0.5 + jnp.abs(jax.random.normal(ks[4], (hidden,), jnp.float32))

    # 'red_1x1': Conv2d(hidden, oup, 1, 1, 0, bias=False) + BN (act=False -> no ReLU6)
    w2 = 0.2 * jax.random.normal(ks[5], (oup, hidden, 1, 1), jnp.float32)   # OIHW
    g2 = 1.0 + 0.1 * jax.random.normal(ks[6], (oup,), jnp.float32)
    beta2 = 0.1 * jax.random.normal(ks[7], (oup,), jnp.float32)
    mu2 = 0.1 * jax.random.normal(ks[8], (oup,), jnp.float32)
    var2 = 0.5 + jnp.abs(jax.random.normal(ks[9], (oup,), jnp.float32))

    # Fold BatchNorm (inference form) into conv weights / biases.
    s1 = g1 / jnp.sqrt(var1 + eps)
    w1_f = w1 * s1[:, None, None, None]
    b1_f = beta1 - mu1 * s1
    s2 = g2 / jnp.sqrt(var2 + eps)
    w2_f = w2 * s2[:, None, None, None]
    b2_f = beta2 - mu2 * s2

    # Kernel layouts for the transposed (channels-on-sublanes) formulation:
    #   w1t[o, (ki*3+kj)*C + c] = w1_f[o, c, ki, kj]   -> (hidden, 9*C)
    #   w2t[o, h]               = w2_f[o, h, 0, 0]     -> (oup, hidden)
    w1t = jnp.transpose(w1_f, (0, 2, 3, 1)).reshape(hidden, 9 * inp)
    w2t = w2_f[:, :, 0, 0]

    use_res = (stride == 1) and (inp == oup)
    return dict(w1t=w1t.astype(compute_dtype), b1=b1_f.reshape(hidden, 1),
                w2t=w2t.astype(compute_dtype), b2=b2_f.reshape(oup, 1),
                use_res=use_res)


def reference_forward(x_nchw, params):
    """Pure-JAX reference (same folded-BN / dtype semantics) for correctness checking."""
    cdt = params["w1t"].dtype
    N, C, H, W = x_nchw.shape
    hidden = params["w1t"].shape[0]
    Cout = params["w2t"].shape[0]

    # Reconstruct the folded 3x3 weight in OIHW from the kernel layout.
    w1_oihw = jnp.transpose(params["w1t"].reshape(hidden, 3, 3, C), (0, 3, 1, 2))
    y = lax.conv_general_dilated(
        x_nchw.astype(cdt), w1_oihw, (1, 1), "SAME",
        dimension_numbers=("NCHW", "OIHW", "NCHW"),
        preferred_element_type=jnp.float32)
    y = jnp.clip(y + params["b1"].reshape(1, hidden, 1, 1), 0.0, 6.0)
    y = jnp.einsum("oh,nhij->noij", params["w2t"], y.astype(cdt),
                   preferred_element_type=jnp.float32)
    y = y + params["b2"].reshape(1, Cout, 1, 1)
    if params["use_res"]:
        y = y + x_nchw.astype(jnp.float32)
    return y.astype(x_nchw.dtype)


if __name__ == "__main__":
    key = jax.random.PRNGKey(0)
    kx, kp = jax.random.split(key)

    # InvertedResidual(inp=4, oup=4, stride=1, expand_ratio=4) -> hidden_dim = 16
    N, C, H, W = 2, 4, 16, 16
    inp, oup, stride, expand_ratio = C, 4, 1, 4.0

    x = jax.random.normal(kx, (N, C, H, W), jnp.float32)

    # Exact-semantics check with f32 compute.
    params_f32 = make_params(kp, inp, oup, stride, expand_ratio,
                             compute_dtype=jnp.float32)
    out_f32 = jax.block_until_ready(inverted_residual(x, params_f32))
    ref_f32 = jax.block_until_ready(reference_forward(x, params_f32))
    assert out_f32.shape == (N, oup, H, W), out_f32.shape
    err_f32 = float(jnp.max(jnp.abs(out_f32 - ref_f32)))
    assert jnp.allclose(out_f32, ref_f32, atol=2e-4, rtol=2e-4), err_f32

    # Fast path: bf16 MXU inputs, f32 accumulation, f32 epilogue + f32 residual.
    params_bf16 = make_params(kp, inp, oup, stride, expand_ratio,
                              compute_dtype=jnp.bfloat16)
    out_bf16 = jax.block_until_ready(inverted_residual(x, params_bf16))
    ref_bf16 = jax.block_until_ready(reference_forward(x, params_bf16))
    err_bf16 = float(jnp.max(jnp.abs(out_bf16 - ref_bf16)))
    assert jnp.allclose(out_bf16, ref_bf16, atol=5e-2, rtol=5e-2), err_bf16

    print("KERNEL_OK")
</pallas_src>

<mosaic_0001>
module attributes {stable_mosaic.version = 11 : i64} {
  func.func @_inverted_residual_kernel(%arg0: i32, %arg1: memref<1x4x256xf32, #tpu.memory_space<vmem>>, %arg2: memref<16x36xf32, #tpu.memory_space<vmem>>, %arg3: memref<16x1xf32, #tpu.memory_space<vmem>>, %arg4: memref<4x16xf32, #tpu.memory_space<vmem>>, %arg5: memref<4x1xf32, #tpu.memory_space<vmem>>, %arg6: memref<1x4x256xf32, #tpu.memory_space<vmem>>) attributes {dimension_semantics = [#tpu.dimension_semantics<parallel>], iteration_bounds = array<i64: 2>, scalar_prefetch = 0 : i64, scratch_operands = 0 : i64, tpu.core_type = #tpu.core_type<tc>, window_params = [{transform_indices = @transform_0, window_bounds = array<i64: 1, 4, 256>}, {pipeline_mode = #tpu.pipeline_mode<synchronous>, transform_indices = @transform_1, window_bounds = array<i64: 16, 36>}, {pipeline_mode = #tpu.pipeline_mode<synchronous>, transform_indices = @transform_2, window_bounds = array<i64: 16, 1>}, {pipeline_mode = #tpu.pipeline_mode<synchronous>, transform_indices = @transform_3, window_bounds = array<i64: 4, 16>}, {pipeline_mode = #tpu.pipeline_mode<synchronous>, transform_indices = @transform_4, window_bounds = array<i64: 4, 1>}, {transform_indices = @transform_5, window_bounds = array<i64: 1, 4, 256>}]} {
    %c0 = arith.constant 0 : index
    %c0_0 = arith.constant 0 : index
    %c0_1 = arith.constant 0 : index
    %0 = vector.load %arg1[%c0, %c0_0, %c0_1] : memref<1x4x256xf32, #tpu.memory_space<vmem>>, vector<1x4x256xf32>
    %1 = tpu.iota {dimensions = array<i32: 2>} : vector<1x1x256xi32>
    %c16_i32 = arith.constant 16 : i32
    %c0_i32 = arith.constant 0 : i32
    %2 = arith.cmpi eq, %c16_i32, %c0_i32 : i32
    %c1_i32 = arith.constant 1 : i32
    %3 = arith.select %2, %c1_i32, %c16_i32 : i32
    %4 = vector.broadcast %3 : i32 to vector<1x1x256xi32>
    %5 = arith.remsi %1, %4 : vector<1x1x256xi32>
    %c0_i32_2 = arith.constant 0 : i32
    %6 = vector.broadcast %c0_i32_2 : i32 to vector<1x1x256xi32>
    %7 = arith.cmpi ne, %5, %6 : vector<1x1x256xi32>
    %c0_i32_3 = arith.constant 0 : i32
    %8 = vector.broadcast %c0_i32_3 : i32 to vector<1x1x256xi32>
    %9 = arith.cmpi slt, %5, %8 : vector<1x1x256xi32>
    %c0_i32_4 = arith.constant 0 : i32
    %10 = arith.cmpi slt, %3, %c0_i32_4 : i32
    %11 = vector.broadcast %10 : i1 to vector<1x1x256xi1>
    %12 = vector.broadcast %11 : vector<1x1x256xi1> to vector<1x1x256xi1>
    %13 = arith.xori %9, %12 : vector<1x1x256xi1>
    %14 = arith.andi %13, %7 : vector<1x1x256xi1>
    %15 = vector.broadcast %3 : i32 to vector<1x1x256xi32>
    %16 = arith.addi %5, %15 : vector<1x1x256xi32>
    %17 = arith.select %14, %16, %5 : vector<1x1x256xi1>, vector<1x1x256xi32>
    %c16_i32_5 = arith.constant 16 : i32
    %18 = vector.broadcast %c16_i32_5 : i32 to vector<1x1x256xi32>
    %19 = arith.cmpi sge, %1, %18 : vector<1x1x256xi32>
    %c240_i32 = arith.constant 240 : i32
    %20 = vector.broadcast %c240_i32 : i32 to vector<1x1x256xi32>
    %21 = arith.cmpi slt, %1, %20 : vector<1x1x256xi32>
    %c1_i32_6 = arith.constant 1 : i32
    %22 = vector.broadcast %c1_i32_6 : i32 to vector<1x1x256xi32>
    %23 = arith.cmpi sge, %17, %22 : vector<1x1x256xi32>
    %c14_i32 = arith.constant 14 : i32
    %24 = vector.broadcast %c14_i32 : i32 to vector<1x1x256xi32>
    %25 = arith.cmpi sle, %17, %24 : vector<1x1x256xi32>
    %26 = vector.extract_strided_slice %0 {offsets = [0, 0, 239], sizes = [1, 4, 17], strides = [1, 1, 1]} : vector<1x4x256xf32> to vector<1x4x17xf32>
    %27 = vector.extract_strided_slice %0 {offsets = [0, 0, 0], sizes = [1, 4, 239], strides = [1, 1, 1]} : vector<1x4x256xf32> to vector<1x4x239xf32>
    %28 = tpu.concatenate %26, %27 in 2 : vector<1x4x17xf32>, vector<1x4x239xf32> -> vector<1x4x256xf32>
    %29 = arith.andi %19, %23 : vector<1x1x256xi1>
    %cst = arith.constant 0.000000e+00 : f32
    %30 = vector.shape_cast %29 : vector<1x1x256xi1> to vector<1x1x256xi1>
    %31 = vector.broadcast %30 : vector<1x1x256xi1> to vector<1x4x256xi1>
    %32 = vector.broadcast %cst : f32 to vector<1x4x256xf32>
    %33 = arith.select %31, %28, %32 : vector<1x4x256xi1>, vector<1x4x256xf32>
    %34 = vector.extract_strided_slice %0 {offsets = [0, 0, 240], sizes = [1, 4, 16], strides = [1, 1, 1]} : vector<1x4x256xf32> to vector<1x4x16xf32>
    %35 = vector.extract_strided_slice %0 {offsets = [0, 0, 0], sizes = [1, 4, 240], strides = [1, 1, 1]} : vector<1x4x256xf32> to vector<1x4x240xf32>
    %36 = tpu.concatenate %34, %35 in 2 : vector<1x4x16xf32>, vector<1x4x240xf32> -> vector<1x4x256xf32>
    %cst_7 = arith.constant 0.000000e+00 : f32
    %37 = vector.shape_cast %19 : vector<1x1x256xi1> to vector<1x1x256xi1>
    %38 = vector.broadcast %37 : vector<1x1x256xi1> to vector<1x4x256xi1>
    %39 = vector.broadcast %cst_7 : f32 to vector<1x4x256xf32>
    %40 = arith.select %38, %36, %39 : vector<1x4x256xi1>, vector<1x4x256xf32>
    %41 = vector.extract_strided_slice %0 {offsets = [0, 0, 241], sizes = [1, 4, 15], strides = [1, 1, 1]} : vector<1x4x256xf32> to vector<1x4x15xf32>
    %42 = vector.extract_strided_slice %0 {offsets = [0, 0, 0], sizes = [1, 4, 241], strides = [1, 1, 1]} : vector<1x4x256xf32> to vector<1x4x241xf32>
    %43 = tpu.concatenate %41, %42 in 2 : vector<1x4x15xf32>, vector<1x4x241xf32> -> vector<1x4x256xf32>
    %44 = arith.andi %19, %25 : vector<1x1x256xi1>
    %cst_8 = arith.constant 0.000000e+00 : f32
    %45 = vector.shape_cast %44 : vector<1x1x256xi1> to vector<1x1x256xi1>
    %46 = vector.broadcast %45 : vector<1x1x256xi1> to vector<1x4x256xi1>
    %47 = vector.broadcast %cst_8 : f32 to vector<1x4x256xf32>
    %48 = arith.select %46, %43, %47 : vector<1x4x256xi1>, vector<1x4x256xf32>
    %49 = vector.extract_strided_slice %0 {offsets = [0, 0, 255], sizes = [1, 4, 1], strides = [1, 1, 1]} : vector<1x4x256xf32> to vector<1x4x1xf32>
    %50 = vector.extract_strided_slice %0 {offsets = [0, 0, 0], sizes = [1, 4, 255], strides = [1, 1, 1]} : vector<1x4x256xf32> to vector<1x4x255xf32>
    %51 = tpu.concatenate %49, %50 in 2 : vector<1x4x1xf32>, vector<1x4x255xf32> -> vector<1x4x256xf32>
    %cst_9 = arith.constant 0.000000e+00 : f32
    %52 = vector.shape_cast %23 : vector<1x1x256xi1> to vector<1x1x256xi1>
    %53 = vector.broadcast %52 : vector<1x1x256xi1> to vector<1x4x256xi1>
    %54 = vector.broadcast %cst_9 : f32 to vector<1x4x256xf32>
    %55 = arith.select %53, %51, %54 : vector<1x4x256xi1>, vector<1x4x256xf32>
    %56 = vector.extract_strided_slice %0 {offsets = [0, 0, 1], sizes = [1, 4, 255], strides = [1, 1, 1]} : vector<1x4x256xf32> to vector<1x4x255xf32>
    %57 = vector.extract_strided_slice %0 {offsets = [0, 0, 0], sizes = [1, 4, 1], strides = [1, 1, 1]} : vector<1x4x256xf32> to vector<1x4x1xf32>
    %58 = tpu.concatenate %56, %57 in 2 : vector<1x4x255xf32>, vector<1x4x1xf32> -> vector<1x4x256xf32>
    %cst_10 = arith.constant 0.000000e+00 : f32
    %59 = vector.shape_cast %25 : vector<1x1x256xi1> to vector<1x1x256xi1>
    %60 = vector.broadcast %59 : vector<1x1x256xi1> to vector<1x4x256xi1>
    %61 = vector.broadcast %cst_10 : f32 to vector<1x4x256xf32>
    %62 = arith.select %60, %58, %61 : vector<1x4x256xi1>, vector<1x4x256xf32>
    %63 = vector.extract_strided_slice %0 {offsets = [0, 0, 15], sizes = [1, 4, 241], strides = [1, 1, 1]} : vector<1x4x256xf32> to vector<1x4x241xf32>
    %64 = vector.extract_strided_slice %0 {offsets = [0, 0, 0], sizes = [1, 4, 15], strides = [1, 1, 1]} : vector<1x4x256xf32> to vector<1x4x15xf32>
    %65 = tpu.concatenate %63, %64 in 2 : vector<1x4x241xf32>, vector<1x4x15xf32> -> vector<1x4x256xf32>
    %66 = arith.andi %21, %23 : vector<1x1x256xi1>
    %cst_11 = arith.constant 0.000000e+00 : f32
    %67 = vector.shape_cast %66 : vector<1x1x256xi1> to vector<1x1x256xi1>
    %68 = vector.broadcast %67 : vector<1x1x256xi1> to vector<1x4x256xi1>
    %69 = vector.broadcast %cst_11 : f32 to vector<1x4x256xf32>
    %70 = arith.select %68, %65, %69 : vector<1x4x256xi1>, vector<1x4x256xf32>
    %71 = vector.extract_strided_slice %0 {offsets = [0, 0, 16], sizes = [1, 4, 240], strides = [1, 1, 1]} : vector<1x4x256xf32> to vector<1x4x240xf32>
    %72 = vector.extract_strided_slice %0 {offsets = [0, 0, 0], sizes = [1, 4, 16], strides = [1, 1, 1]} : vector<1x4x256xf32> to vector<1x4x16xf32>
    %73 = tpu.concatenate %71, %72 in 2 : vector<1x4x240xf32>, vector<1x4x16xf32> -> vector<1x4x256xf32>
    %cst_12 = arith.constant 0.000000e+00 : f32
    %74 = vector.shape_cast %21 : vector<1x1x256xi1> to vector<1x1x256xi1>
    %75 = vector.broadcast %74 : vector<1x1x256xi1> to vector<1x4x256xi1>
    %76 = vector.broadcast %cst_12 : f32 to vector<1x4x256xf32>
    %77 = arith.select %75, %73, %76 : vector<1x4x256xi1>, vector<1x4x256xf32>
    %78 = vector.extract_strided_slice %0 {offsets = [0, 0, 17], sizes = [1, 4, 239], strides = [1, 1, 1]} : vector<1x4x256xf32> to vector<1x4x239xf32>
    %79 = vector.extract_strided_slice %0 {offsets = [0, 0, 0], sizes = [1, 4, 17], strides = [1, 1, 1]} : vector<1x4x256xf32> to vector<1x4x17xf32>
    %80 = tpu.concatenate %78, %79 in 2 : vector<1x4x239xf32>, vector<1x4x17xf32> -> vector<1x4x256xf32>
    %81 = arith.andi %21, %25 : vector<1x1x256xi1>
    %cst_13 = arith.constant 0.000000e+00 : f32
    %82 = vector.shape_cast %81 : vector<1x1x256xi1> to vector<1x1x256xi1>
    %83 = vector.broadcast %82 : vector<1x1x256xi1> to vector<1x4x256xi1>
    %84 = vector.broadcast %cst_13 : f32 to vector<1x4x256xf32>
    %85 = arith.select %83, %80, %84 : vector<1x4x256xi1>, vector<1x4x256xf32>
    %86 = tpu.concatenate %33, %40, %48, %55, %0, %62, %70, %77, %85 in 1 : vector<1x4x256xf32>, vector<1x4x256xf32>, vector<1x4x256xf32>, vector<1x4x256xf32>, vector<1x4x256xf32>, vector<1x4x256xf32>, vector<1x4x256xf32>, vector<1x4x256xf32>, vector<1x4x256xf32> -> vector<1x36x256xf32>
    %c0_14 = arith.constant 0 : index
    %c0_15 = arith.constant 0 : index
    %87 = vector.load %arg2[%c0_14, %c0_15] : memref<16x36xf32, #tpu.memory_space<vmem>>, vector<16x36xf32>
    %88 = vector.shape_cast %87 : vector<16x36xf32> to vector<1x16x36xf32>
    "tpu.trace_start"() <{level = 10 : i32, message = "bkc,bcm->bkm"}> : () -> ()
    %cst_16 = arith.constant dense<0.000000e+00> : vector<1x16x256xf32>
    %89 = tpu.matmul %88, %86, %cst_16 {dimension_numbers = #tpu.dot_dimension_numbers<[2], [1], [1], [2], [0, 0, 0, 1, 1, 2], [0], [0]>} : vector<1x16x36xf32>, vector<1x36x256xf32>, vector<1x16x256xf32> -> vector<1x16x256xf32>
    "tpu.trace_stop"() : () -> ()
    %c0_17 = arith.constant 0 : index
    %c0_18 = arith.constant 0 : index
    %90 = vector.load %arg3[%c0_17, %c0_18] : memref<16x1xf32, #tpu.memory_space<vmem>>, vector<16x1xf32>
    %91 = vector.shape_cast %90 : vector<16x1xf32> to vector<1x16x1xf32>
    %92 = vector.broadcast %91 : vector<1x16x1xf32> to vector<1x16x256xf32>
    %93 = arith.addf %89, %92 : vector<1x16x256xf32>
    %cst_19 = arith.constant 0.000000e+00 : f32
    %cst_20 = arith.constant 6.000000e+00 : f32
    %94 = vector.broadcast %cst_19 : f32 to vector<1x16x256xf32>
    %95 = arith.maximumf %94, %93 : vector<1x16x256xf32>
    %96 = vector.broadcast %cst_20 : f32 to vector<1x16x256xf32>
    %97 = arith.minimumf %96, %95 : vector<1x16x256xf32>
    %c0_21 = arith.constant 0 : index
    %c0_22 = arith.constant 0 : index
    %98 = vector.load %arg4[%c0_21, %c0_22] : memref<4x16xf32, #tpu.memory_space<vmem>>, vector<4x16xf32>
    %99 = vector.shape_cast %98 : vector<4x16xf32> to vector<1x4x16xf32>
    "tpu.trace_start"() <{level = 10 : i32, message = "bok,bkm->bom"}> : () -> ()
    %cst_23 = arith.constant dense<0.000000e+00> : vector<1x4x256xf32>
    %100 = tpu.matmul %99, %97, %cst_23 {dimension_numbers = #tpu.dot_dimension_numbers<[2], [1], [1], [2], [0, 0, 0, 1, 1, 2], [0], [0]>} : vector<1x4x16xf32>, vector<1x16x256xf32>, vector<1x4x256xf32> -> vector<1x4x256xf32>
    "tpu.trace_stop"() : () -> ()
    %c0_24 = arith.constant 0 : index
    %c0_25 = arith.constant 0 : index
    %101 = vector.load %arg5[%c0_24, %c0_25] : memref<4x1xf32, #tpu.memory_space<vmem>>, vector<4x1xf32>
    %102 = vector.shape_cast %101 : vector<4x1xf32> to vector<1x4x1xf32>
    %103 = vector.broadcast %102 : vector<1x4x1xf32> to vector<1x4x256xf32>
    %104 = arith.addf %100, %103 : vector<1x4x256xf32>
    %105 = arith.addf %104, %0 : vector<1x4x256xf32>
    %c0_26 = arith.constant 0 : index
    %c0_27 = arith.constant 0 : index
    %c0_28 = arith.constant 0 : index
    %106 = vector.load %arg6[%c0_26, %c0_27, %c0_28] : memref<1x4x256xf32, #tpu.memory_space<vmem>>, vector<1x4x256xf32>
    tpu.vector_store %arg6[%c0_26, %c0_27, %c0_28], %105 {strides = array<i32>} : memref<1x4x256xf32, #tpu.memory_space<vmem>>, vector<1x4x256xf32>,
    return
  }
  func.func @transform_0(%arg0: i32) -> (i32, i32, i32) {
    %c0_i32 = arith.constant 0 : i32
    %c0_i32_0 = arith.constant 0 : i32
    %c0_i32_1 = arith.constant 0 : i32
    return %arg0, %c0_i32, %c0_i32_0 : i32, i32, i32
  }
  func.func @transform_1(%arg0: i32) -> (i32, i32) {
    %c0_i32 = arith.constant 0 : i32
    %c0_i32_0 = arith.constant 0 : i32
    %c0_i32_1 = arith.constant 0 : i32
    return %c0_i32, %c0_i32_0 : i32, i32
  }
  func.func @transform_2(%arg0: i32) -> (i32, i32) {
    %c0_i32 = arith.constant 0 : i32
    %c0_i32_0 = arith.constant 0 : i32
    %c0_i32_1 = arith.constant 0 : i32
    return %c0_i32, %c0_i32_0 : i32, i32
  }
  func.func @transform_3(%arg0: i32) -> (i32, i32) {
    %c0_i32 = arith.constant 0 : i32
    %c0_i32_0 = arith.constant 0 : i32
    %c0_i32_1 = arith.constant 0 : i32
    return %c0_i32, %c0_i32_0 : i32, i32
  }
  func.func @transform_4(%arg0: i32) -> (i32, i32) {
    %c0_i32 = arith.constant 0 : i32
    %c0_i32_0 = arith.constant 0 : i32
    %c0_i32_1 = arith.constant 0 : i32
    return %c0_i32, %c0_i32_0 : i32, i32
  }
  func.func @transform_5(%arg0: i32) -> (i32, i32, i32) {
    %c0_i32 = arith.constant 0 : i32
    %c0_i32_0 = arith.constant 0 : i32
    %c0_i32_1 = arith.constant 0 : i32
    return %arg0, %c0_i32, %c0_i32_0 : i32, i32, i32
  }
}

</mosaic_0001>

<llo_original>
// kernel: tpu_custom_call.1
$region0: #{tpu_custom_call.1}
  #allocation0 [shape = 'u32[]', space=smem, size = 0x4, offset = 0x4, fixed_abs, tag = 'smem constant byte address 0x4 - core index']
  #allocation1 [shape = 'u32[144,128]{1,0:T(1,128)}', space=vmem, size = 0x12000, scoped, tag = 'internal scratch']
  %s0 = inlined_call_operand.vmem [shape: f32[2,4,256], index: 0, kind: input, shape index: {}]
  %s1 = inlined_call_operand.hbm [shape: f32[16,36], index: 1, kind: input, shape index: {}]
  %s2 = inlined_call_operand.vmem [shape: f32[16,1], index: 2, kind: input, shape index: {}]
  %s3 = inlined_call_operand.vmem [shape: f32[4,16], index: 3, kind: input, shape index: {}]
  %s4 = inlined_call_operand.vmem [shape: f32[4,1], index: 4, kind: input, shape index: {}]
  %s5 = inlined_call_operand.hbm [shape: f32[2,4,256], index: 5, kind: output, shape index: {}]
  %s6 = sld [smem:[#allocation0]]
  $region57: #{tpu_custom_call.1} parent=0
    _
  %s8 = ssub.s32 1, %s6
  %s9 = scalar_select 0, %s8, %s6
  $region1: #{tpu_custom_call.1} parent=0
    #allocation2 [shape = 'u8[8192]{0}', space=vmem, size = 0x2000, scoped, tag = 'input window, operand 1, single buffered']
    #allocation3 [shape = 's32[2]{0}', space=sflag, size = 0x8, scoped, tag = 'scoped memory for tpu_custom_call.1']
    #allocation4 [shape = 's32[2]{0}', space=sflag, size = 0x8, scoped, tag = 'scoped memory for tpu_custom_call.1']
    #allocation5 [shape = 'u8[8192]{0}', space=vmem, size = 0x2000, scoped, tag = 'output window, operand 0']
    %10 = vsyncpa [#allocation3], 0
    %11 = vsyncpa [#allocation4], 0
    %s12 = scalar_lea.sflag [#allocation4], 1
    %13 = vsyncpa %s12, 0
    loop: start=0, step=1, limit=4
    $region2: #{tpu_custom_call.1} parent=1 // loop_pre_header
      _
    $region3: #{tpu_custom_call.1} parent=1 // loop_header
      %s15 = sphi 0, %s19
      %p16 = scmp.ge.s32.totalorder %s15, 4
      %s25 = sphi 0, %s27
      %s28 = sphi 0, %s25
      %s29 = sphi 0, %s28
      %s45 = sphi 0, %s29
      %s49 = sphi 0, %s49
      %s51 = sphi 0, %s49
      %s52 = sphi 0, %s51
      %s66 = sphi 0, %s52
      %s70 = sphi 0, %s70
      %s72 = sphi 0, %s70
      %s73 = sphi 0, %s72
      %s87 = sphi 0, %s73
      %s91 = sphi 0, %s91
      %s93 = sphi 0, %s91
      %s94 = sphi 0, %s93
      %s108 = sphi 0, %s94
      %s112 = sphi 0, %s112
      %s114 = sphi 0, %s112
      %s115 = sphi 0, %s114
      %s129 = sphi 0, %s115
      %s135 = sphi 0, %s137
      %s138 = sphi 0, %s135
      %s139 = sphi 0, %s138
      %s155 = sphi 0, %s139
    $region4: #{tpu_custom_call.1} parent=1 // loop_header_branch
      %18 = sbr.rel (%p16) target = $region8
    $region5: #{tpu_custom_call.1} parent=1 // loop_body
      %s20 = ssub.s32 %s15, 1
      %s21 = ssub.s32 %s15, 2
      %s22 = sadd.s32 %s15, 1
      %s23 = ssub.s32 %s15, %s22
      %p24 = scmp.eq.s32.totalorder %s23, 0
      %s26 = sadd.s32 %s25, 1
      %s27 = scalar_select %p24, %s25, %s26
      %p30 = pneg %p24
      %p31 = scmp.eq.s32.totalorder %s15, 1
      %p32 = por %p30, %p31
      %p33 = scmp.ne.s32.totalorder %s25, %s28
      %p34 = scmp.eq.s32.totalorder %s15, 0
      %p35 = por %p33, %p34
      %p36 = scmp.ne.s32.totalorder %s25, %s28
      %p37 = scmp.eq.s32.totalorder %s20, 1
      %p38 = por %p36, %p37
      %p39 = scmp.ne.s32.totalorder %s28, %s29
      %p40 = scmp.eq.s32.totalorder %s20, 0
      %p41 = por %p39, %p40
      %p42 = scmp.ne.s32.totalorder %s28, %s29
      %p43 = scmp.eq.s32.totalorder %s21, 1
      %p44 = por %p42, %p43
      %p46 = scmp.ne.s32.totalorder %s29, %s45
      %p47 = scmp.eq.s32.totalorder %s21, 0
      %p48 = por %p46, %p47
      %s50 = sadd.s32 %s49, 1
      %p53 = scmp.eq.s32.totalorder %s15, 1
      %p54 = scmp.ne.s32.totalorder %s49, %s51
      %p55 = scmp.eq.s32.totalorder %s15, 0
      %p56 = por %p54, %p55
      %p57 = scmp.ne.s32.totalorder %s49, %s51
      %p58 = scmp.eq.s32.totalorder %s20, 1
      %p59 = por %p57, %p58
      %p60 = scmp.ne.s32.totalorder %s51, %s52
      %p61 = scmp.eq.s32.totalorder %s20, 0
      %p62 = por %p60, %p61
      %p63 = scmp.ne.s32.totalorder %s51, %s52
      %p64 = scmp.eq.s32.totalorder %s21, 1
      %p65 = por %p63, %p64
      %p67 = scmp.ne.s32.totalorder %s52, %s66
      %p68 = scmp.eq.s32.totalorder %s21, 0
      %p69 = por %p67, %p68
      %s71 = sadd.s32 %s70, 1
      %p74 = scmp.eq.s32.totalorder %s15, 1
      %p75 = scmp.ne.s32.totalorder %s70, %s72
      %p76 = scmp.eq.s32.totalorder %s15, 0
      %p77 = por %p75, %p76
      %p78 = scmp.ne.s32.totalorder %s70, %s72
      %p79 = scmp.eq.s32.totalorder %s20, 1
      %p80 = por %p78, %p79
      %p81 = scmp.ne.s32.totalorder %s72, %s73
      %p82 = scmp.eq.s32.totalorder %s20, 0
      %p83 = por %p81, %p82
      %p84 = scmp.ne.s32.totalorder %s72, %s73
      %p85 = scmp.eq.s32.totalorder %s21, 1
      %p86 = por %p84, %p85
      %p88 = scmp.ne.s32.totalorder %s73, %s87
      %p89 = scmp.eq.s32.totalorder %s21, 0
      %p90 = por %p88, %p89
      %s92 = sadd.s32 %s91, 1
      %p95 = scmp.eq.s32.totalorder %s15, 1
      %p96 = scmp.ne.s32.totalorder %s91, %s93
      %p97 = scmp.eq.s32.totalorder %s15, 0
      %p98 = por %p96, %p97
      %p99 = scmp.ne.s32.totalorder %s91, %s93
      %p100 = scmp.eq.s32.totalorder %s20, 1
      %p101 = por %p99, %p100
      %p102 = scmp.ne.s32.totalorder %s93, %s94
      %p103 = scmp.eq.s32.totalorder %s20, 0
      %p104 = por %p102, %p103
      %p105 = scmp.ne.s32.totalorder %s93, %s94
      %p106 = scmp.eq.s32.totalorder %s21, 1
      %p107 = por %p105, %p106
      %p109 = scmp.ne.s32.totalorder %s94, %s108
      %p110 = scmp.eq.s32.totalorder %s21, 0
      %p111 = por %p109, %p110
      %s113 = sadd.s32 %s112, 1
      %p116 = scmp.eq.s32.totalorder %s15, 1
      %p117 = scmp.ne.s32.totalorder %s112, %s114
      %p118 = scmp.eq.s32.totalorder %s15, 0
      %p119 = por %p117, %p118
      %p120 = scmp.ne.s32.totalorder %s112, %s114
      %p121 = scmp.eq.s32.totalorder %s20, 1
      %p122 = por %p120, %p121
      %p123 = scmp.ne.s32.totalorder %s114, %s115
      %p124 = scmp.eq.s32.totalorder %s20, 0
      %p125 = por %p123, %p124
      %p126 = scmp.ne.s32.totalorder %s114, %s115
      %p127 = scmp.eq.s32.totalorder %s21, 1
      %p128 = por %p126, %p127
      %p130 = scmp.ne.s32.totalorder %s115, %s129
      %p131 = scmp.eq.s32.totalorder %s21, 0
      %p132 = por %p130, %p131
      %s133 = ssub.s32 %s15, %s22
      %p134 = scmp.eq.s32.totalorder %s133, 0
      %s136 = sadd.s32 %s135, 1
      %s137 = scalar_select %p134, %s135, %s136
      %p140 = pneg %p134
      %p141 = scmp.eq.s32.totalorder %s15, 1
      %p142 = por %p140, %p141
      %p143 = scmp.ne.s32.totalorder %s135, %s138
      %p144 = scmp.eq.s32.totalorder %s15, 0
      %p145 = por %p143, %p144
      %p146 = scmp.ne.s32.totalorder %s135, %s138
      %p147 = scmp.eq.s32.totalorder %s20, 1
      %p148 = por %p146, %p147
      %p149 = scmp.ne.s32.totalorder %s138, %s139
      %p150 = scmp.eq.s32.totalorder %s20, 0
      %p151 = por %p149, %p150
      %p152 = scmp.ne.s32.totalorder %s138, %s139
      %p153 = scmp.eq.s32.totalorder %s21, 1
      %p154 = por %p152, %p153
      %p156 = scmp.ne.s32.totalorder %s139, %s155
      %p157 = scmp.eq.s32.totalorder %s21, 0
      %p158 = por %p156, %p157
      %p159 = scmp.le.s32.totalorder 1, %s15
      %p160 = scmp.lt.s32.totalorder %s15, 3
      %p161 = pnand %p159, %p160
      %p162 = pneg %p161
      // Predicated region
      $region9: #{tpu_custom_call.1} parent=5 // pred_check
        _
      $region10: #{tpu_custom_call.1} parent=5 // pred_check_branch
        %164 = sbr.rel (%p161) target = $region12
      $region11: #{tpu_custom_call.1} parent=5 // pred_region
        %s165 = ssub.s32 %s15, 1
        // Predicated region
        $region13: #{tpu_custom_call.1} parent=11 // pred_check
          %p166 = pneg %p62
        $region14: #{tpu_custom_call.1} parent=11 // pred_check_branch
          %168 = sbr.rel (%p166) target = $region16
        $region15: #{tpu_custom_call.1} parent=11 // pred_region
          %s170 = ssub.s32 256, 256
          %171 = vsyncadd [#allocation3], %s170
          %s172 = sshll.u32 [#allocation2], 4
          %s173 = int_to_ptr.vmem [resolvable:$true] %s172
          %178 = dma.hbm_to_vmem [thread:$0]  %s1, 256, %s173, [#allocation3], 128, 128, 8
        $region16: #{tpu_custom_call.1} parent=11 // pred_fallthru
          _
        // Predicated region
        $region17: #{tpu_custom_call.1} parent=11 // pred_check
          %p179 = pneg %p83
        $region18: #{tpu_custom_call.1} parent=11 // pred_check_branch
          %181 = sbr.rel (%p179) target = $region20
        $region19: #{tpu_custom_call.1} parent=11 // pred_region
          _
        $region20: #{tpu_custom_call.1} parent=11 // pred_fallthru
          _
        // Predicated region
        $region21: #{tpu_custom_call.1} parent=11 // pred_check
          %p182 = pneg %p104
        $region22: #{tpu_custom_call.1} parent=11 // pred_check_branch
          %184 = sbr.rel (%p182) target = $region24
        $region23: #{tpu_custom_call.1} parent=11 // pred_region
          _
        $region24: #{tpu_custom_call.1} parent=11 // pred_fallthru
          _
        // Predicated region
        $region25: #{tpu_custom_call.1} parent=11 // pred_check
          %p185 = pneg %p125
        $region26: #{tpu_custom_call.1} parent=11 // pred_check_branch
          %187 = sbr.rel (%p185) target = $region28
        $region27: #{tpu_custom_call.1} parent=11 // pred_region
          _
        $region28: #{tpu_custom_call.1} parent=11 // pred_fallthru
          _
      $region12: #{tpu_custom_call.1} parent=5 // pred_fallthru
        _
      %p188 = scmp.lt.s32.totalorder %s15, 2
      // Predicated region
      $region29: #{tpu_custom_call.1} parent=5 // pred_check
        %p189 = pneg %p188
      $region30: #{tpu_custom_call.1} parent=5 // pred_check_branch
        %191 = sbr.rel (%p189) target = $region32
      $region31: #{tpu_custom_call.1} parent=5 // pred_region
        // Predicated region
        $region33: #{tpu_custom_call.1} parent=31 // pred_check
          %p192 = pneg %p35
        $region34: #{tpu_custom_call.1} parent=31 // pred_check_branch
          %194 = sbr.rel (%p192) target = $region36
        $region35: #{tpu_custom_call.1} parent=31 // pred_region
          %p195 = scmp.lt.s32.totalorder %s15, 1
          %s196 = scalar_select %p195, %s15, 1
          %s197 = smul.addr %s196, 2
          %s198 = smul.addr %s197, 4
          %s199 = scalar_lea.vmem %s0, %s198
        $region36: #{tpu_custom_call.1} parent=31 // pred_fallthru
          _
      $region32: #{tpu_custom_call.1} parent=5 // pred_fallthru
        _
      %p200 = scmp.le.s32.totalorder 1, %s15
      %p201 = scmp.lt.s32.totalorder %s15, 3
      %p202 = pnand %p200, %p201
      %p203 = pneg %p202
      // Predicated region
      $region37: #{tpu_custom_call.1} parent=5 // pred_check
        _
      $region38: #{tpu_custom_call.1} parent=5 // pred_check_branch
        %205 = sbr.rel (%p202) target = $region40
      $region39: #{tpu_custom_call.1} parent=5 // pred_region
        %s206 = ssub.s32 %s15, 1
        // Predicated region
        $region41: #{tpu_custom_call.1} parent=39 // pred_check
          %p207 = pneg %p62
        $region42: #{tpu_custom_call.1} parent=39 // pred_check_branch
          %209 = sbr.rel (%p207) target = $region44
        $region43: #{tpu_custom_call.1} parent=39 // pred_region
          %210 = dma.done [#allocation3], 256
        $region44: #{tpu_custom_call.1} parent=39 // pred_fallthru
          _
        %p211 = scmp.lt.s32.totalorder %s20, 1
        %s212 = scalar_select %p211, %s20, 1
        %s213 = smul.addr %s212, 2
        %s214 = smul.addr %s213, 4
        %s215 = scalar_lea.vmem %s0, %s214
        %p216 = pneg %p41
        %p217 = pneg %p38
        %p218 = pneg %p62
        %p219 = pneg %p59
        %p220 = pneg %p83
        %p221 = pneg %p80
        %p222 = pneg %p104
        %p223 = pneg %p101
        %p224 = pneg %p125
        %p225 = pneg %p122
        %p226 = pneg %p151
        %p227 = pneg %p148
        %s228 = sand.u32 %s138, 1
        %s229 = scalar_lea.sflag [#allocation4], %s228
        %s230 = sand.u32 %s138, 1
        %s231 = smul.addr %s230, 8
        %s232 = scalar_lea.vmem [#allocation5], %s231
        %p233 = scmp.lt.s32.totalorder %s20, 1
        %s234 = scalar_select %p233, %s20, 1
        %s235 = smul.addr %s234, 2
        %s236 = smul.addr %s235, 4
        %s237 = scalar_lea.vmem %s0, %s236
        %v238 = vld [vmem:[%s237] sm:$0xff]
        %v239 = vlaneseq
        %v240 = vand.u32 %v239, 127
        %v241 = vadd.s32 %v240, 128
        %vm242 = vcmp.lt.s32.totalorder %v240, 0
        %v243 = vsub.s32 0, %v240
        %v244 = vsel %vm242, %v243, %v240
        %v245 = vshrl.u32 %v244, 4
        %v246 = vand.u32 %v244, 15
        %v247 = vsub.s32 0, %v246
        %v248 = vsel %vm242, %v247, %v246
        %vm249 = vcmp.lt.s32.totalorder %v241, 0
        %v250 = vsub.s32 0, %v241
        %v251 = vsel %vm249, %v250, %v241
        %v252 = vshrl.u32 %v251, 4
        %v253 = vand.u32 %v251, 15
        %v254 = vsub.s32 0, %v253
        %v255 = vsel %vm249, %v254, %v253
        %vm256 = vcmp.ne.s32.totalorder %v248, 0
        %vm257 = vcmp.ne.s32.totalorder %v255, 0
        %vm258 = vcmp.lt.s32.totalorder %v248, 0
        %vm259 = vcmp.lt.s32.totalorder %v255, 0
        %vm260 = vmand %vm258, %vm256
        %vm261 = vmand %vm259, %vm257
        %v262 = vadd.s32 %v248, 16
        %v263 = vadd.s32 %v255, 16
        %v264 = vsel %vm260, %v262, %v248
        %v265 = vsel %vm261, %v263, %v255
        %vm266 = vcmp.ge.s32.totalorder %v240, 16
        %vm267 = vcmp.ge.s32.totalorder %v241, 16
        %vm268 = vcmp.lt.s32.totalorder %v240, 240
        %vm269 = vcmp.lt.s32.totalorder %v241, 240
        %vm270 = vcmp.ge.s32.totalorder %v264, 1
        %vm271 = vcmp.ge.s32.totalorder %v265, 1
        %vm272 = vcmp.le.s32.totalorder %v264, 14
        %vm273 = vcmp.le.s32.totalorder %v265, 14
        %v275 = vcombine.high %v238, %v238
        %276 = vrot.lane.b32.xlu0 %v275, 17
        %v277 = vpop.permute.xlu0 %276
        %279 = vrot.lane.b32.xlu0 %v238, 17
        %v280 = vpop.permute.xlu0 %279
        %vm281 = vcmask 138240
        %v282 = vsel %vm281, %v280, %v277
        %v285 = vsel %vm281, %v277, %v280
        %vm286 = vmand %vm266, %vm270
        %vm287 = vmand %vm267, %vm271
        %v288 = vsel %vm286, 1, 0
        %v289 = vsel %vm287, 1, 0
        %vm290 = vcmp.eq.s32.totalorder %v288, 1
        %vm291 = vcmp.eq.s32.totalorder %v289, 1
        %v292 = vsel %vm290, %v285, 0.0
        %v293 = vsel %vm291, %v282, 0.0
        %294 = vrot.lane.b32.xlu0 %v275, 16
        %v295 = vpop.permute.xlu0 %294
        %297 = vrot.lane.b32.xlu0 %v238, 16
        %v298 = vpop.permute.xlu0 %297
        %vm299 = vcmask 130048
        %v300 = vsel %vm299, %v298, %v295
        %v303 = vsel %vm299, %v295, %v298
        %v304 = vsel %vm266, 1, 0
        %v305 = vsel %vm267, 1, 0
        %vm306 = vcmp.eq.s32.totalorder %v304, 1
        %vm307 = vcmp.eq.s32.totalorder %v305, 1
        %v308 = vsel %vm306, %v303, 0.0
        %v309 = vsel %vm307, %v300, 0.0
        %310 = vrot.lane.b32.xlu0 %v275, 15
        %v311 = vpop.permute.xlu0 %310
        %313 = vrot.lane.b32.xlu0 %v238, 15
        %v314 = vpop.permute.xlu0 %313
        %vm315 = vcmask 121856
        %v316 = vsel %vm315, %v314, %v311
        %v319 = vsel %vm315, %v311, %v314
        %vm320 = vmand %vm266, %vm272
        %vm321 = vmand %vm267, %vm273
        %v322 = vsel %vm320, 1, 0
        %v323 = vsel %vm321, 1, 0
        %vm324 = vcmp.eq.s32.totalorder %v322, 1
        %vm325 = vcmp.eq.s32.totalorder %v323, 1
        %v326 = vsel %vm324, %v319, 0.0
        %v327 = vsel %vm325, %v316, 0.0
        %328 = vrot.lane.b32.xlu0 %v275, 1
        %v329 = vpop.permute.xlu0 %328
        %331 = vrot.lane.b32.xlu0 %v238, 1
        %v332 = vpop.permute.xlu0 %331
        %vm333 = vcmask 7168
        %v334 = vsel %vm333, %v332, %v329
        %v337 = vsel %vm333, %v329, %v332
        %v338 = vsel %vm270, 1, 0
        %v339 = vsel %vm271, 1, 0
        %vm340 = vcmp.eq.s32.totalorder %v338, 1
        %vm341 = vcmp.eq.s32.totalorder %v339, 1
        %v342 = vsel %vm340, %v337, 0.0
        %v343 = vsel %vm341, %v334, 0.0
        %344 = vrot.lane.b32.xlu0 %v238, 127
        %v345 = vpop.permute.xlu0 %344
        %346 = vrot.lane.b32.xlu0 %v275, 127
        %v347 = vpop.permute.xlu0 %346
        %vm348 = vcmask 1039360
        %v349 = vsel %vm348, %v345, %v347
        %v353 = vsel %vm348, %v347, %v345
        %v354 = vsel %vm272, 1, 0
        %v355 = vsel %vm273, 1, 0
        %vm356 = vcmp.eq.s32.totalorder %v354, 1
        %vm357 = vcmp.eq.s32.totalorder %v355, 1
        %v358 = vsel %vm356, %v349, 0.0
        %v359 = vsel %vm357, %v353, 0.0
        %360 = vrot.lane.b32.xlu0 %v238, 113
        %v361 = vpop.permute.xlu0 %360
        %362 = vrot.lane.b32.xlu0 %v275, 113
        %v363 = vpop.permute.xlu0 %362
        %vm364 = vcmask 924672
        %v365 = vsel %vm364, %v361, %v363
        %v369 = vsel %vm364, %v363, %v361
        %vm370 = vmand %vm268, %vm270
        %vm371 = vmand %vm269, %vm271
        %v372 = vsel %vm370, 1, 0
        %v373 = vsel %vm371, 1, 0
        %vm374 = vcmp.eq.s32.totalorder %v372, 1
        %vm375 = vcmp.eq.s32.totalorder %v373, 1
        %v376 = vsel %vm374, %v365, 0.0
        %v377 = vsel %vm375, %v369, 0.0
        %378 = vrot.lane.b32.xlu0 %v238, 112
        %v379 = vpop.permute.xlu0 %378
        %380 = vrot.lane.b32.xlu0 %v275, 112
        %v381 = vpop.permute.xlu0 %380
        %vm382 = vcmask 916480
        %v383 = vsel %vm382, %v379, %v381
        %v387 = vsel %vm382, %v381, %v379
        %v388 = vsel %vm268, 1, 0
        %v389 = vsel %vm269, 1, 0
        %vm390 = vcmp.eq.s32.totalorder %v388, 1
        %vm391 = vcmp.eq.s32.totalorder %v389, 1
        %v392 = vsel %vm390, %v383, 0.0
        %v393 = vsel %vm391, %v387, 0.0
        %394 = vrot.lane.b32.xlu0 %v238, 111
        %v395 = vpop.permute.xlu0 %394
        %396 = vrot.lane.b32.xlu0 %v275, 111
        %v397 = vpop.permute.xlu0 %396
        %vm398 = vcmask 908288
        %v399 = vsel %vm398, %v395, %v397
        %v403 = vsel %vm398, %v397, %v395
        %vm404 = vmand %vm268, %vm272
        %vm405 = vmand %vm269, %vm273
        %v406 = vsel %vm404, 1, 0
        %v407 = vsel %vm405, 1, 0
        %vm408 = vcmp.eq.s32.totalorder %v406, 1
        %vm409 = vcmp.eq.s32.totalorder %v407, 1
        %v410 = vsel %vm408, %v399, 0.0
        %v411 = vsel %vm409, %v403, 0.0
        %v414 = vrot.slane %v308, 4
        %v415 = vrot.slane %v309, 4
        %v420 = vrot.slane %v342, 4
        %v421 = vrot.slane %v343, 4
        %v427 = vrot.slane %v358, 4
        %v428 = vrot.slane %v359, 4
        %v433 = vrot.slane %v392, 4
        %v434 = vrot.slane %v393, 4
        %vm437 = vcmask 1043456
        %v438 = vsel %vm437, %v292, %v414
        %v439 = vsel %vm437, %v293, %v415
        %v440 = vsel %vm437, %v326, %v420
        %v441 = vsel %vm437, %v327, %v421
        %v442 = vsel %vm437, %v238, %v427
        %v443 = vsel %vm437, %v275, %v428
        %v444 = vsel %vm437, %v376, %v433
        %v445 = vsel %vm437, %v377, %v434
        %v446 = vld [vmem:[#allocation2] sm:$0xff]
        %v447 = vld [vmem:[#allocation2 + $0x8] sm:$0xff]
        %v448 = vld [vmem:[%s2] sm:$0xff]
        %v449 = vld [vmem:[%s2 + $0x8] sm:$0xff]
        %451 = vset.pattern.permute.xlu0 0
        %452 = vperm.xlu0 %451, %v448
        %v453 = vpop.permute.xlu0 %452
        %456 = vset.pattern.permute.xlu0 0
        %457 = vperm.xlu0 %456, %v449
        %v458 = vpop.permute.xlu0 %457
        %vm460 = vcmask 293888
        %v462 = vsel %vm460, %v446, 0
        %v465 = vsel %vm460, %v447, 0
        %v468 = vsel %vm437, %v410, 0
        %v471 = vsel %vm437, %v411, 0
        %473 = vmatprep.subr.mxu0 %v439
        %474 = vmatpush1.msra.mxu0 %v438
        %475 = vmatprep.subr.mxu0 %v441
        %476 = vmatpush1.msra.mxu0 %v440
        %477 = vmatprep.subr.mxu0 %v443
        %478 = vmatpush1.msra.mxu0 %v442
        %479 = vmatprep.subr.mxu0 %v445
        %480 = vmatpush1.msra.mxu0 %v444
        %481 = vmatprep.subr.mxu0 %v471
        %482 = vmatpush1.msra.mxu0 %v468
        %483 = vmatprep.subr.mxu0 0.0
        %484 = vmatpush1.msra.mxu0 0.0
        %485 = vmatprep.subr.mxu0 0.0
        %486 = vmatpush1.msra.mxu0 0.0
        %487 = vmatprep.subr.mxu0 0.0
        %488 = vmatpush1.msra.mxu0 0.0
        %489 = vmatprep.subr.mxu0 0.0
        %490 = vmatpush1.msra.mxu0 0.0
        %491 = vmatprep.subr.mxu0 0.0
        %492 = vmatpush1.msra.mxu0 0.0
        %493 = vmatprep.subr.mxu0 0.0
        %494 = vmatpush1.msra.mxu0 0.0
        %495 = vmatprep.subr.mxu0 0.0
        %496 = vmatpush1.msra.mxu0 0.0
        %497 = vmatprep.subr.mxu0 0.0
        %498 = vmatpush1.msra.mxu0 0.0
        %499 = vmatprep.subr.mxu0 0.0
        %500 = vmatpush1.msra.mxu0 0.0
        %501 = vmatprep.subr.mxu0 0.0
        %502 = vmatpush1.msra.mxu0 0.0
        %503 = vmatprep.subr.mxu0 0.0
        %504 = vmatpush1.msra.mxu0 0.0
        %505 = vmatprep.subr.mxu0 0.0
        %506 = vmatpush1.msra.mxu0 0.0
        %507 = vmatprep.subr.mxu0 0.0
        %508 = vmatpush1.msra.mxu0 0.0
        %509 = vmatprep.subr.mxu0 0.0
        %510 = vmatpush1.msra.mxu0 0.0
        %511 = vmatprep.subr.mxu0 0.0
        %512 = vmatpush1.msra.mxu0 0.0
        %513 = vmatprep.subr.mxu0 0.0
        %514 = vmatpush1.msra.mxu0 0.0
        %515 = vmatprep.subr.mxu0 0.0
        %516 = vmatpush1.msra.mxu0 0.0
        %517 = vmatprep.subr.mxu0 0.0
        %518 = vmatpush1.msra.mxu0 0.0
        %519 = vmatprep.subr.mxu0 0.0
        %520 = vmatpush1.msra.mxu0 0.0
        %521 = vmatprep.subr.mxu0 0.0
        %522 = vmatpush1.msra.mxu0 0.0
        %523 = vmatprep.subr.mxu0 0.0
        %524 = vmatpush1.msra.mxu0 0.0
        %525 = vmatprep.subr.mxu0 0.0
        %526 = vmatpush1.msra.mxu0 0.0
        %527 = vmatprep.subr.mxu0 0.0
        %528 = vmatpush1.msra.mxu0 0.0
        %529 = vmatprep.subr.mxu0 0.0
        %530 = vmatpush1.msra.mxu0 0.0
        %531 = vmatprep.subr.mxu0 0.0
        %532 = vmatpush1.msra.mxu0 0.0
        %533 = vmatprep.subr.mxu0 0.0
        %534 = vmatpush1.msra.mxu0 0.0
        %535 = vmatprep.subr.mxu0 0.0
        %536 = vmatpush1.msra.mxu0 0.0
        %537 = vmatprep.mubr.f32.mxu0 0.0
        %538 = vmatmul.mubr.f32.gmra.mrb[0].mxu0 %v462
        %v539 = vpop.f32.mrb[0].mxu0
        %v540 = vadd.f32 %v453, %v539
        %v541 = vpop.f32.mrb[0].mxu0
        %v542 = vadd.f32 %v453, %v541
        %543 = vmatprep.mubr.f32.mxu0 0.0
        %544 = vmatmul.mubr.f32.gmra.mrb[0].mxu0 %v465
        %v545 = vpop.f32.mrb[0].mxu0
        %v546 = vadd.f32 %v458, %v545
        %v547 = vpop.f32.mrb[0].mxu0
        %v548 = vadd.f32 %v458, %v547
        %549 = vdwg.mxu0
        %v550 = vmax.f32 %v540, 0.0
        %v551 = vmax.f32 %v542, 0.0
        %v552 = vmax.f32 %v546, 0.0
        %v553 = vmax.f32 %v548, 0.0
        %v554 = vmin.f32 %v550, 6.0
        %v555 = vmin.f32 %v551, 6.0
        %v556 = vmin.f32 %v552, 6.0
        %v557 = vmin.f32 %v553, 6.0
        %v558 = vld [vmem:[%s3] sm:$0xf]
        %v559 = vld [vmem:[%s4] sm:$0xf]
        %561 = vset.pattern.permute.xlu0 0
        %562 = vperm.xlu0 %561, %v559
        %v563 = vpop.permute.xlu0 %562
        %v566 = vsel %vm299, %v558, 0
        %568 = vmatprep.subr.mxu0 %v555
        %569 = vmatpush1.msra.mxu0 %v554
        %570 = vmatprep.subr.mxu0 %v557
        %571 = vmatpush1.msra.mxu0 %v556
        %572 = vmatprep.subr.mxu0 0.0
        %573 = vmatpush1.msra.mxu0 0.0
        %574 = vmatprep.subr.mxu0 0.0
        %575 = vmatpush1.msra.mxu0 0.0
        %576 = vmatprep.subr.mxu0 0.0
        %577 = vmatpush1.msra.mxu0 0.0
        %578 = vmatprep.subr.mxu0 0.0
        %579 = vmatpush1.msra.mxu0 0.0
        %580 = vmatprep.subr.mxu0 0.0
        %581 = vmatpush1.msra.mxu0 0.0
        %582 = vmatprep.subr.mxu0 0.0
        %583 = vmatpush1.msra.mxu0 0.0
        %584 = vmatprep.subr.mxu0 0.0
        %585 = vmatpush1.msra.mxu0 0.0
        %586 = vmatprep.subr.mxu0 0.0
        %587 = vmatpush1.msra.mxu0 0.0
        %588 = vmatprep.subr.mxu0 0.0
        %589 = vmatpush1.msra.mxu0 0.0
        %590 = vmatprep.subr.mxu0 0.0
        %591 = vmatpush1.msra.mxu0 0.0
        %592 = vmatprep.subr.mxu0 0.0
        %593 = vmatpush1.msra.mxu0 0.0
        %594 = vmatprep.subr.mxu0 0.0
        %595 = vmatpush1.msra.mxu0 0.0
        %596 = vmatprep.subr.mxu0 0.0
        %597 = vmatpush1.msra.mxu0 0.0
        %598 = vmatprep.subr.mxu0 0.0
        %599 = vmatpush1.msra.mxu0 0.0
        %600 = vmatprep.subr.mxu0 0.0
        %601 = vmatpush1.msra.mxu0 0.0
        %602 = vmatprep.subr.mxu0 0.0
        %603 = vmatpush1.msra.mxu0 0.0
        %604 = vmatprep.subr.mxu0 0.0
        %605 = vmatpush1.msra.mxu0 0.0
        %606 = vmatprep.subr.mxu0 0.0
        %607 = vmatpush1.msra.mxu0 0.0
        %608 = vmatprep.subr.mxu0 0.0
        %609 = vmatpush1.msra.mxu0 0.0
        %610 = vmatprep.subr.mxu0 0.0
        %611 = vmatpush1.msra.mxu0 0.0
        %612 = vmatprep.subr.mxu0 0.0
        %613 = vmatpush1.msra.mxu0 0.0
        %614 = vmatprep.subr.mxu0 0.0
        %615 = vmatpush1.msra.mxu0 0.0
        %616 = vmatprep.subr.mxu0 0.0
        %617 = vmatpush1.msra.mxu0 0.0
        %618 = vmatprep.subr.mxu0 0.0
        %619 = vmatpush1.msra.mxu0 0.0
        %620 = vmatprep.subr.mxu0 0.0
        %621 = vmatpush1.msra.mxu0 0.0
        %622 = vmatprep.subr.mxu0 0.0
        %623 = vmatpush1.msra.mxu0 0.0
        %624 = vmatprep.subr.mxu0 0.0
        %625 = vmatpush1.msra.mxu0 0.0
        %626 = vmatprep.subr.mxu0 0.0
        %627 = vmatpush1.msra.mxu0 0.0
        %628 = vmatprep.subr.mxu0 0.0
        %629 = vmatpush1.msra.mxu0 0.0
        %630 = vmatprep.subr.mxu0 0.0
        %631 = vmatpush1.msra.mxu0 0.0
        %632 = vmatprep.mubr.f32.mxu0 0.0
        %633 = vmatmul.mubr.f32.gmra.mrb[0].mxu0 %v566
        %v634 = vpop.f32.mrb[0].mxu0
        %v635 = vadd.f32 %v563, %v634
        %v636 = vpop.f32.mrb[0].mxu0
        %v637 = vadd.f32 %v563, %v636
        %638 = vdwg.mxu0
        %v639 = vadd.f32 %v635, %v238
        %v640 = vadd.f32 %v637, %v275
        %v643 = vcombine.low %v639, %v640
        %645 = vst [vmem:[%s232] sm:$0xff] %v643
        %s646 = sand.u32 %s138, 1
        %s647 = scalar_lea.sflag [#allocation4], %s646
        %s648 = sand.u32 %s138, 1
        %s649 = smul.addr %s648, 8
        %s650 = scalar_lea.vmem [#allocation5], %s649
        // Predicated region
        $region45: #{tpu_custom_call.1} parent=39 // pred_check
          %p651 = pneg %p148
        $region46: #{tpu_custom_call.1} parent=39 // pred_check_branch
          %653 = sbr.rel (%p651) target = $region48
        $region47: #{tpu_custom_call.1} parent=39 // pred_region
          %s655 = ssub.s32 128, 128
          %656 = vsyncadd %s647, %s655
          %s657 = smul.addr %s20, 2
          %s658 = smul.addr %s657, 64
          %s659 = scalar_lea.hbm %s5, %s658
          %s661 = sshll.u32 %s650, 4
          %s662 = int_to_ptr.vmem [resolvable:$true] %s661
          %664 = dma.vmem_to_hbm [thread:$0]  %s662, 128, %s659, %s647
        $region48: #{tpu_custom_call.1} parent=39 // pred_fallthru
          _
      $region40: #{tpu_custom_call.1} parent=5 // pred_fallthru
        _
      %p665 = scmp.le.s32.totalorder 2, %s15
      // Predicated region
      $region49: #{tpu_custom_call.1} parent=5 // pred_check
        %p666 = pneg %p665
      $region50: #{tpu_custom_call.1} parent=5 // pred_check_branch
        %668 = sbr.rel (%p666) target = $region52
      $region51: #{tpu_custom_call.1} parent=5 // pred_region
        %s669 = ssub.s32 %s15, 2
        // Predicated region
        $region53: #{tpu_custom_call.1} parent=51 // pred_check
          %p670 = pneg %p154
        $region54: #{tpu_custom_call.1} parent=51 // pred_check_branch
          %672 = sbr.rel (%p670) target = $region56
        $region55: #{tpu_custom_call.1} parent=51 // pred_region
          %s673 = sand.u32 %s139, 1
          %s674 = scalar_lea.sflag [#allocation4], %s673
          %s675 = sand.u32 %s139, 1
          %s676 = smul.addr %s675, 8
          %s677 = scalar_lea.vmem [#allocation5], %s676
          %678 = dma.done %s674, 128
        $region56: #{tpu_custom_call.1} parent=51 // pred_fallthru
          _
      $region52: #{tpu_custom_call.1} parent=5 // pred_fallthru
        _
    $region6: #{tpu_custom_call.1} parent=1 // loop_footer
      %s19 = sadd.s32 1, %s15
    $region7: #{tpu_custom_call.1} parent=1 // loop_footer_branch
      %14 = sbr.rel target = $region3
    $region8: #{tpu_custom_call.1} parent=1 // loop_exit
      _
    %679 = vsyncpa [#allocation3], 1
    %s680 = scalar_lea.sflag [#allocation3], 1
    %681 = vsyncpa %s680, 1
    %682 = vsyncpa [#allocation4], 1
    %s683 = scalar_lea.sflag [#allocation4], 1
    %684 = vsyncpa %s683, 1

</llo_original>
